<compile_context>
chip_gen: v7x
topology: tpu7x:2x2x1
jax: 0.10.0
libtpu: 0.0.40
codegen_flags: <defaults>
</compile_context>

<pallas_src>
import numpy as np
import jax
import jax.numpy as jnp
from jax.experimental import pallas as pl
from jax.experimental.pallas import tpu as pltpu

# ---- Problem configuration (mirrors ConvShapeletNet.__init__) ---------------
INPUT_SIZE = 168                               # loader.dataset.input_size (L)
N_VARIATES = 2                                 # loader.dataset.n_variates
OUTPUT_SIZE = 5                                # loader.dataset.output_size
BAG_RATIO = 0.15
BAG_SIZE = int(BAG_RATIO * INPUT_SIZE)         # 25
STRIDE = BAG_SIZE // 4                         # 6
N_OUT = 10
OUT_PER_GROUP = N_OUT // N_VARIATES            # 5 (grouped conv)
L_OUT = (INPUT_SIZE - BAG_SIZE) // STRIDE + 1  # 24 (Conv1d output length)
POOL_K = 3
POOL_LEN = (L_OUT - POOL_K) // POOL_K + 1      # 8 (MaxPool1d(3) output length)
FC_IN = N_OUT * POOL_LEN                       # 80
assert FC_IN == 8 * N_OUT, "module hard-codes fc input = 8 * n_out"

CL = N_VARIATES * INPUT_SIZE                   # 336 flattened (C, L) per row
PAD = 128                                      # lane-dense pad width
AN = POOL_K * PAD                              # 384 = conv matmul output width
TB_MAX = 2048                                  # max batch tile rows per grid step
                                               # (~9 MB peak VMEM incl. dbl-buffers)


def _round_up(a, b):
    return (a + b - 1) // b * b


def _pick_tile(B):
    """Rows per grid step: single full-batch block when small (no pad, no ragged
    block), otherwise >=2..4 steps (keeps both v7x TCs busy) capped at TB_MAX."""
    if B <= 256:
        return B                                        # block == full array dim
    if B <= 1024:
        return _round_up(pl.cdiv(B, 2), 8)              # 2 steps
    return min(TB_MAX, _round_up(pl.cdiv(B, 4), 256))   # >=4 steps, VMEM-capped


# -----------------------------------------------------------------------------
# Kernel: one batch tile -> fused conv(bf16 matmul) + bias + square + pool + FC.
# -----------------------------------------------------------------------------
def conv_shapelet_kernel(x_ref, a_ref, cb_ref, fcw_ref, fcb_ref, out_ref):
    # Grouped conv (all 10*24 outputs, grouped by pool phase k) as one bf16
    # MXU matmul with f32 accumulation.
    y = jnp.dot(x_ref[...], a_ref[...],
                preferred_element_type=jnp.float32)          # (TB, 384) f32
    y = y + cb_ref[...]                                      # conv bias (f32)
    z = -(y * y)                                             # (-conv**2), pre-pool
    # MaxPool1d(3): max over the 3 phases; each phase is a 128-lane-aligned
    # column block, flat index m = o*POOL_LEN + j (== torch flatten order).
    pooled = jnp.maximum(z[:, 0 * PAD:1 * PAD],
                         jnp.maximum(z[:, 1 * PAD:2 * PAD],
                                     z[:, 2 * PAD:3 * PAD]))  # (TB,128), cols>=80 are 0
    # Linear(80 -> OUTPUT_SIZE), zero-padded to a 128x128 bf16 MXU tile.
    out = jnp.dot(pooled.astype(jnp.bfloat16), fcw_ref[...],
                  preferred_element_type=jnp.float32) + fcb_ref[...]
    out_ref[...] = out.astype(out_ref.dtype)                 # (TB,128) bf16, unmasked


# -----------------------------------------------------------------------------
# One-time host-side operand construction (hoisted out of the jitted forward;
# conv weights are frozen ones in the module, fc weights change only on update).
# -----------------------------------------------------------------------------
def prepare_operands(conv_w, conv_b, fc_w, fc_b):
    w = np.asarray(conv_w, np.float32).reshape(N_OUT, BAG_SIZE)   # w[o, kk]
    b = np.asarray(conv_b, np.float32)
    m = np.arange(FC_IN)                                          # flat pooled index
    o = m // POOL_LEN                                             # out channel
    j = m % POOL_LEN                                              # pool slot
    c = o // OUT_PER_GROUP                                        # input channel (group)
    kk = np.arange(BAG_SIZE)

    a = np.zeros((CL, AN), np.float32)
    cb = np.zeros((AN,), np.float32)
    for k in range(POOL_K):                                       # pool phase
        t = POOL_K * j + k                                        # conv time index
        rows = (c[:, None] * INPUT_SIZE
                + t[:, None] * STRIDE + kk[None, :])              # (80, 25)
        cols = k * PAD + m                                        # (80,)
        a[rows, cols[:, None]] = w[o]                             # unique (row,col)
        cb[cols] = b[o]

    fcw = np.zeros((PAD, PAD), np.float32)
    fcw[:FC_IN, :OUTPUT_SIZE] = np.asarray(fc_w, np.float32).T
    fcb = np.zeros((1, PAD), np.float32)
    fcb[0, :OUTPUT_SIZE] = np.asarray(fc_b, np.float32)

    return (jnp.asarray(a, jnp.bfloat16),            # conv-as-matmul weights (exact: ones)
            jnp.asarray(cb.reshape(1, AN), jnp.float32),
            jnp.asarray(fcw, jnp.bfloat16),
            jnp.asarray(fcb, jnp.float32))


@jax.jit
def conv_shapelet_forward(x, a_mat, cb, fcw, fcb):
    """x: (B, INPUT_SIZE, N_VARIATES) -- what the torch forward receives."""
    B = x.shape[0]
    # torch .view(B, C, L) is a raw row-major reinterpretation == jnp.reshape.
    x_flat = x.reshape(B, CL)
    if x_flat.dtype != jnp.bfloat16:
        # bf16 feed to the MXU; in a real pipeline x arrives bf16 from the
        # producer so this cast (and its HBM pass) disappears.
        x_flat = x_flat.astype(jnp.bfloat16)

    tb = _pick_tile(B)
    grid = (pl.cdiv(B, tb),)        # no wrapper-side jnp.pad; Pallas masks the
                                    # ragged trailing block (garbage rows only
                                    # feed discarded output rows).
    out = pl.pallas_call(
        conv_shapelet_kernel,
        out_shape=jax.ShapeDtypeStruct((B, PAD), jnp.bfloat16),
        grid_spec=pltpu.PrefetchScalarGridSpec(
            num_scalar_prefetch=0,
            grid=grid,
            in_specs=[
                pl.BlockSpec((tb, CL), lambda i: (i, 0)),     # x tile (pipelined)
                pl.BlockSpec((CL, AN), lambda i: (0, 0)),     # conv matrix (resident)
                pl.BlockSpec((1, AN), lambda i: (0, 0)),      # conv bias (resident)
                pl.BlockSpec((PAD, PAD), lambda i: (0, 0)),   # fc weights (resident)
                pl.BlockSpec((1, PAD), lambda i: (0, 0)),     # fc bias (resident)
            ],
            out_specs=pl.BlockSpec((tb, PAD), lambda i: (i, 0)),
        ),
        compiler_params=pltpu.CompilerParams(
            dimension_semantics=("parallel",),                # 2-TC sharding on v7x
            vmem_limit_bytes=32 * 1024 * 1024,                # headroom; < physical on all gens
        ),
    )(x_flat, a_mat, cb, fcw, fcb)
    return out[:, :OUTPUT_SIZE].astype(jnp.float32)


# -----------------------------------------------------------------------------
# Pure numpy reference (mirrors the PyTorch forward exactly) for verification.
# -----------------------------------------------------------------------------
def reference_forward(x, conv_w, conv_b, fc_w, fc_b):
    B = x.shape[0]
    xn = np.asarray(x, np.float64).reshape(B, N_VARIATES, INPUT_SIZE)
    w = np.asarray(conv_w, np.float64).reshape(N_OUT, BAG_SIZE)
    cb = np.asarray(conv_b, np.float64)
    y = np.zeros((B, N_OUT, L_OUT), np.float64)
    for o in range(N_OUT):
        ci = o // OUT_PER_GROUP
        for t in range(L_OUT):
            seg = xn[:, ci, t * STRIDE:t * STRIDE + BAG_SIZE]
            y[:, o, t] = seg @ w[o] + cb[o]
    neg = -(y ** 2)
    pooled = neg.reshape(B, N_OUT, POOL_LEN, POOL_K).max(axis=-1)
    flat = pooled.reshape(B, FC_IN)
    return flat @ np.asarray(fc_w, np.float64).T + np.asarray(fc_b, np.float64)


if __name__ == "__main__":
    key = jax.random.PRNGKey(0)
    kx, kcb, kfw, kfb = jax.random.split(key, 4)

    B = 2
    x = jax.random.normal(kx, (B, INPUT_SIZE, N_VARIATES), dtype=jnp.float32)

    # Parameters (deterministic, synthetic):
    # conv weights are forced to ones in the module (requires_grad=False).
    conv_w = jnp.ones((N_OUT, 1, BAG_SIZE), dtype=jnp.float32)
    conv_b = jax.random.uniform(kcb, (N_OUT,), minval=-0.1, maxval=0.1,
                                dtype=jnp.float32)
    fc_w = 0.05 * jax.random.normal(kfw, (OUTPUT_SIZE, FC_IN), dtype=jnp.float32)
    fc_b = 0.05 * jax.random.normal(kfb, (OUTPUT_SIZE,), dtype=jnp.float32)

    # Hoisted one-time operand construction (not inside the per-call forward).
    operands = prepare_operands(conv_w, conv_b, fc_w, fc_b)

    out = conv_shapelet_forward(x, *operands)
    out = jax.block_until_ready(out)
    assert out.shape == (B, OUTPUT_SIZE) and out.dtype == jnp.float32

    ref = reference_forward(x, conv_w, conv_b, fc_w, fc_b)
    rel_err = float(np.max(np.abs(np.asarray(out, np.float64) - ref))
                    / (np.max(np.abs(ref)) + 1e-9))
    assert rel_err < 5e-2, f"kernel vs reference mismatch: rel_err={rel_err}"

    print("KERNEL_OK")
</pallas_src>

<mosaic_0001>
module attributes {stable_mosaic.version = 11 : i64} {
  func.func @conv_shapelet_kernel(%arg0: i32, %arg1: memref<2x336xbf16, #tpu.memory_space<vmem>>, %arg2: memref<336x384xbf16, #tpu.memory_space<vmem>>, %arg3: memref<1x384xf32, #tpu.memory_space<vmem>>, %arg4: memref<128x128xbf16, #tpu.memory_space<vmem>>, %arg5: memref<1x128xf32, #tpu.memory_space<vmem>>, %arg6: memref<2x128xbf16, #tpu.memory_space<vmem>>) attributes {dimension_semantics = [#tpu.dimension_semantics<parallel>], iteration_bounds = array<i64: 1>, scalar_prefetch = 0 : i64, scratch_operands = 0 : i64, tpu.core_type = #tpu.core_type<tc>, window_params = [{transform_indices = @transform_0, window_bounds = array<i64: 2, 336>}, {pipeline_mode = #tpu.pipeline_mode<synchronous>, transform_indices = @transform_1, window_bounds = array<i64: 336, 384>}, {pipeline_mode = #tpu.pipeline_mode<synchronous>, transform_indices = @transform_2, window_bounds = array<i64: 1, 384>}, {pipeline_mode = #tpu.pipeline_mode<synchronous>, transform_indices = @transform_3, window_bounds = array<i64: 128, 128>}, {pipeline_mode = #tpu.pipeline_mode<synchronous>, transform_indices = @transform_4, window_bounds = array<i64: 1, 128>}, {transform_indices = @transform_5, window_bounds = array<i64: 2, 128>}]} {
    %c0 = arith.constant 0 : index
    %c0_0 = arith.constant 0 : index
    %0 = vector.load %arg1[%c0, %c0_0] : memref<2x336xbf16, #tpu.memory_space<vmem>>, vector<2x336xbf16>
    %c0_1 = arith.constant 0 : index
    %c0_2 = arith.constant 0 : index
    %1 = vector.load %arg2[%c0_1, %c0_2] : memref<336x384xbf16, #tpu.memory_space<vmem>>, vector<336x384xbf16>
    %cst = arith.constant dense<0.000000e+00> : vector<2x384xf32>
    %2 = tpu.matmul %0, %1, %cst {dimension_numbers = #tpu.dot_dimension_numbers<[1], [0], [0], [1], [0, 0, 1, 1], [], []>} : vector<2x336xbf16>, vector<336x384xbf16>, vector<2x384xf32> -> vector<2x384xf32>
    %c0_3 = arith.constant 0 : index
    %c0_4 = arith.constant 0 : index
    %3 = vector.load %arg3[%c0_3, %c0_4] : memref<1x384xf32, #tpu.memory_space<vmem>>, vector<1x384xf32>
    %4 = vector.broadcast %3 : vector<1x384xf32> to vector<2x384xf32>
    %5 = arith.addf %2, %4 : vector<2x384xf32>
    %6 = arith.mulf %5, %5 : vector<2x384xf32>
    %cst_5 = arith.constant 0.000000e+00 : f32
    %7 = vector.broadcast %cst_5 : f32 to vector<2x384xf32>
    %8 = arith.subf %7, %6 : vector<2x384xf32>
    %9 = vector.extract_strided_slice %8 {offsets = [0, 0], sizes = [2, 128], strides = [1, 1]} : vector<2x384xf32> to vector<2x128xf32>
    %10 = vector.extract_strided_slice %8 {offsets = [0, 128], sizes = [2, 128], strides = [1, 1]} : vector<2x384xf32> to vector<2x128xf32>
    %11 = vector.extract_strided_slice %8 {offsets = [0, 256], sizes = [2, 128], strides = [1, 1]} : vector<2x384xf32> to vector<2x128xf32>
    %12 = arith.maximumf %10, %11 : vector<2x128xf32>
    %13 = arith.maximumf %9, %12 : vector<2x128xf32>
    %14 = arith.truncf %13 : vector<2x128xf32> to vector<2x128xbf16>
    %c0_6 = arith.constant 0 : index
    %c0_7 = arith.constant 0 : index
    %15 = vector.load %arg4[%c0_6, %c0_7] : memref<128x128xbf16, #tpu.memory_space<vmem>>, vector<128x128xbf16>
    %cst_8 = arith.constant dense<0.000000e+00> : vector<2x128xf32>
    %16 = tpu.matmul %14, %15, %cst_8 {dimension_numbers = #tpu.dot_dimension_numbers<[1], [0], [0], [1], [0, 0, 1, 1], [], []>} : vector<2x128xbf16>, vector<128x128xbf16>, vector<2x128xf32> -> vector<2x128xf32>
    %c0_9 = arith.constant 0 : index
    %c0_10 = arith.constant 0 : index
    %17 = vector.load %arg5[%c0_9, %c0_10] : memref<1x128xf32, #tpu.memory_space<vmem>>, vector<1x128xf32>
    %18 = vector.broadcast %17 : vector<1x128xf32> to vector<2x128xf32>
    %19 = arith.addf %16, %18 : vector<2x128xf32>
    %20 = arith.truncf %19 : vector<2x128xf32> to vector<2x128xbf16>
    %c0_11 = arith.constant 0 : index
    %c0_12 = arith.constant 0 : index
    %21 = vector.load %arg6[%c0_11, %c0_12] : memref<2x128xbf16, #tpu.memory_space<vmem>>, vector<2x128xbf16>
    tpu.vector_store %arg6[%c0_11, %c0_12], %20 {strides = array<i32>} : memref<2x128xbf16, #tpu.memory_space<vmem>>, vector<2x128xbf16>,
    return
  }
  func.func @transform_0(%arg0: i32) -> (i32, i32) {
    %c0_i32 = arith.constant 0 : i32
    %c0_i32_0 = arith.constant 0 : i32
    return %arg0, %c0_i32 : i32, i32
  }
  func.func @transform_1(%arg0: i32) -> (i32, i32) {
    %c0_i32 = arith.constant 0 : i32
    %c0_i32_0 = arith.constant 0 : i32
    %c0_i32_1 = arith.constant 0 : i32
    return %c0_i32, %c0_i32_0 : i32, i32
  }
  func.func @transform_2(%arg0: i32) -> (i32, i32) {
    %c0_i32 = arith.constant 0 : i32
    %c0_i32_0 = arith.constant 0 : i32
    %c0_i32_1 = arith.constant 0 : i32
    return %c0_i32, %c0_i32_0 : i32, i32
  }
  func.func @transform_3(%arg0: i32) -> (i32, i32) {
    %c0_i32 = arith.constant 0 : i32
    %c0_i32_0 = arith.constant 0 : i32
    %c0_i32_1 = arith.constant 0 : i32
    return %c0_i32, %c0_i32_0 : i32, i32
  }
  func.func @transform_4(%arg0: i32) -> (i32, i32) {
    %c0_i32 = arith.constant 0 : i32
    %c0_i32_0 = arith.constant 0 : i32
    %c0_i32_1 = arith.constant 0 : i32
    return %c0_i32, %c0_i32_0 : i32, i32
  }
  func.func @transform_5(%arg0: i32) -> (i32, i32) {
    %c0_i32 = arith.constant 0 : i32
    %c0_i32_0 = arith.constant 0 : i32
    return %arg0, %c0_i32 : i32, i32
  }
}

</mosaic_0001>

<llo_original>
// kernel: conv_shapelet_forward.1
$region0: #{conv_shapelet_forward.1}
  #allocation0 [shape = 'u32[]', space=smem, size = 0x4, offset = 0x4, fixed_abs, tag = 'smem constant byte address 0x4 - core index']
  #allocation1 [shape = 'u32[144,128]{1,0:T(1,128)}', space=vmem, size = 0x12000, scoped, tag = 'internal scratch']
  %s0 = inlined_call_operand.vmem [shape: bf16[2,336], index: 0, kind: input, shape index: {}]
  %s1 = inlined_call_operand.hbm [shape: bf16[336,384], index: 1, kind: input, shape index: {}]
  %s2 = inlined_call_operand.vmem [shape: f32[1,384], index: 2, kind: input, shape index: {}]
  %s3 = inlined_call_operand.vmem [shape: bf16[128,128], index: 3, kind: input, shape index: {}]
  %s4 = inlined_call_operand.vmem [shape: f32[1,128], index: 4, kind: input, shape index: {}]
  %s5 = inlined_call_operand.vmem [shape: bf16[2,128], index: 5, kind: output, shape index: {}]
  %s6 = sld [smem:[#allocation0]]
  $region34: #{conv_shapelet_forward.1} parent=0
    _
  %s8 = ssub.s32 1, %s6
  %s9 = scalar_select 0, %s8, %s6
  $region1: #{conv_shapelet_forward.1} parent=0
    #allocation2 [shape = 'u8[258048]{0}', space=vmem, size = 0x3f000, scoped, tag = 'input window, operand 1, single buffered']
    #allocation3 [shape = 's32[1]{0}', space=sflag, size = 0x4, scoped, tag = 'scoped memory for conv_shapelet_forward.1']
    %10 = vsyncpa [#allocation3], 0
    // Predicated region
    $region2: #{conv_shapelet_forward.1} parent=1 // pred_check
      _
    $region3: #{conv_shapelet_forward.1} parent=1 // pred_check_branch
      %12 = sbr.rel (0) target = $region5
    $region4: #{conv_shapelet_forward.1} parent=1 // pred_region
      _
    $region5: #{conv_shapelet_forward.1} parent=1 // pred_fallthru
      _
    // Predicated region
    $region6: #{conv_shapelet_forward.1} parent=1 // pred_check
      _
    $region7: #{conv_shapelet_forward.1} parent=1 // pred_check_branch
      %14 = sbr.rel (0) target = $region9
    $region8: #{conv_shapelet_forward.1} parent=1 // pred_region
      %s16 = ssub.s32 8064, 8064
      %17 = vsyncadd [#allocation3], %s16
      %s18 = sshll.u32 [#allocation2], 4
      %s19 = int_to_ptr.vmem [resolvable:$true] %s18
      %24 = dma.hbm_to_vmem [thread:$0]  %s1, 8064, %s19, [#allocation3], 192, 192, 12
    $region9: #{conv_shapelet_forward.1} parent=1 // pred_fallthru
      _
    // Predicated region
    $region10: #{conv_shapelet_forward.1} parent=1 // pred_check
      _
    $region11: #{conv_shapelet_forward.1} parent=1 // pred_check_branch
      %26 = sbr.rel (0) target = $region13
    $region12: #{conv_shapelet_forward.1} parent=1 // pred_region
      _
    $region13: #{conv_shapelet_forward.1} parent=1 // pred_fallthru
      _
    // Predicated region
    $region14: #{conv_shapelet_forward.1} parent=1 // pred_check
      _
    $region15: #{conv_shapelet_forward.1} parent=1 // pred_check_branch
      %28 = sbr.rel (0) target = $region17
    $region16: #{conv_shapelet_forward.1} parent=1 // pred_region
      _
    $region17: #{conv_shapelet_forward.1} parent=1 // pred_fallthru
      _
    // Predicated region
    $region18: #{conv_shapelet_forward.1} parent=1 // pred_check
      _
    $region19: #{conv_shapelet_forward.1} parent=1 // pred_check_branch
      %30 = sbr.rel (0) target = $region21
    $region20: #{conv_shapelet_forward.1} parent=1 // pred_region
      _
    $region21: #{conv_shapelet_forward.1} parent=1 // pred_fallthru
      _
    // Predicated region
    $region22: #{conv_shapelet_forward.1} parent=1 // pred_check
      _
    $region23: #{conv_shapelet_forward.1} parent=1 // pred_check_branch
      %32 = sbr.rel (0) target = $region25
    $region24: #{conv_shapelet_forward.1} parent=1 // pred_region
      %33 = dma.done [#allocation3], 8064
    $region25: #{conv_shapelet_forward.1} parent=1 // pred_fallthru
      _
    %v35 = vld [vmem:[%s0] sm:$0x7]
    %v36 = vld [vmem:[#allocation2] sm:$0xff]
    %v37 = vld [vmem:[#allocation2 + $0x8] sm:$0xf]
    %v38 = vld [vmem:[#allocation2 + $0xc] sm:$0xff]
    %v39 = vld [vmem:[#allocation2 + $0x14] sm:$0xf]
    %v40 = vld [vmem:[#allocation2 + $0x18] sm:$0xff]
    %v41 = vld [vmem:[#allocation2 + $0x20] sm:$0xf]
    %v42 = vld [vmem:[#allocation2 + $0x24] sm:$0xff]
    %v43 = vld [vmem:[#allocation2 + $0x2c] sm:$0xf]
    %v44 = vld [vmem:[#allocation2 + $0x30] sm:$0xff]
    %v45 = vld [vmem:[#allocation2 + $0x38] sm:$0xf]
    %v46 = vld [vmem:[#allocation2 + $0x3c] sm:$0xff]
    %v47 = vld [vmem:[#allocation2 + $0x44] sm:$0xf]
    %v48 = vld [vmem:[#allocation2 + $0x48] sm:$0xff]
    %v49 = vld [vmem:[#allocation2 + $0x50] sm:$0xf]
    %v50 = vld [vmem:[#allocation2 + $0x54] sm:$0xff]
    %v51 = vld [vmem:[#allocation2 + $0x5c] sm:$0xf]
    %v52 = vld [vmem:[#allocation2 + $0x60] sm:$0xff]
    %v53 = vld [vmem:[#allocation2 + $0x68] sm:$0xf]
    %v54 = vld [vmem:[#allocation2 + $0x6c] sm:$0xff]
    %v55 = vld [vmem:[#allocation2 + $0x74] sm:$0xf]
    %v56 = vld [vmem:[#allocation2 + $0x78] sm:$0xff]
    %v57 = vld [vmem:[#allocation2 + $0x80] sm:$0xf]
    %v58 = vld [vmem:[#allocation2 + $0x84] sm:$0xff]
    %v59 = vld [vmem:[#allocation2 + $0x8c] sm:$0xf]
    %v60 = vld [vmem:[#allocation2 + $0x90] sm:$0xff]
    %v61 = vld [vmem:[#allocation2 + $0x98] sm:$0xf]
    %v62 = vld [vmem:[#allocation2 + $0x9c] sm:$0xff]
    %v63 = vld [vmem:[#allocation2 + $0xa4] sm:$0xf]
    %v64 = vld [vmem:[#allocation2 + $0xa8] sm:$0xff]
    %v65 = vld [vmem:[#allocation2 + $0xb0] sm:$0xf]
    %v66 = vld [vmem:[#allocation2 + $0xb4] sm:$0xff]
    %v67 = vld [vmem:[#allocation2 + $0xbc] sm:$0xf]
    %v68 = vld [vmem:[#allocation2 + $0xc0] sm:$0xff]
    %v69 = vld [vmem:[#allocation2 + $0xc8] sm:$0xf]
    %v70 = vld [vmem:[#allocation2 + $0xcc] sm:$0xff]
    %v71 = vld [vmem:[#allocation2 + $0xd4] sm:$0xf]
    %v72 = vld [vmem:[#allocation2 + $0xd8] sm:$0xff]
    %v73 = vld [vmem:[#allocation2 + $0xe0] sm:$0xf]
    %v74 = vld [vmem:[#allocation2 + $0xe4] sm:$0xff]
    %v75 = vld [vmem:[#allocation2 + $0xec] sm:$0xf]
    %v76 = vld [vmem:[#allocation2 + $0xf0] sm:$0xff]
    %v77 = vld [vmem:[#allocation2 + $0xf8] sm:$0xf]
    %v78 = vld [vmem:[#allocation2 + $0xfc] sm:$0xff]
    %v79 = vld [vmem:[#allocation2 + $0x104] sm:$0xf]
    %v80 = vld [vmem:[#allocation2 + $0x108] sm:$0xff]
    %v81 = vld [vmem:[#allocation2 + $0x110] sm:$0xf]
    %v82 = vld [vmem:[#allocation2 + $0x114] sm:$0xff]
    %v83 = vld [vmem:[#allocation2 + $0x11c] sm:$0xf]
    %v84 = vld [vmem:[#allocation2 + $0x120] sm:$0xff]
    %v85 = vld [vmem:[#allocation2 + $0x128] sm:$0xf]
    %v86 = vld [vmem:[#allocation2 + $0x12c] sm:$0xff]
    %v87 = vld [vmem:[#allocation2 + $0x134] sm:$0xf]
    %v88 = vld [vmem:[#allocation2 + $0x138] sm:$0xff]
    %v89 = vld [vmem:[#allocation2 + $0x140] sm:$0xf]
    %v90 = vld [vmem:[#allocation2 + $0x144] sm:$0xff]
    %v91 = vld [vmem:[#allocation2 + $0x14c] sm:$0xf]
    %v92 = vld [vmem:[#allocation2 + $0x150] sm:$0xff]
    %v93 = vld [vmem:[#allocation2 + $0x158] sm:$0xf]
    %v94 = vld [vmem:[#allocation2 + $0x15c] sm:$0xff]
    %v95 = vld [vmem:[#allocation2 + $0x164] sm:$0xf]
    %v96 = vld [vmem:[#allocation2 + $0x168] sm:$0xff]
    %v97 = vld [vmem:[#allocation2 + $0x170] sm:$0xf]
    %v98 = vld [vmem:[#allocation2 + $0x174] sm:$0xff]
    %v99 = vld [vmem:[#allocation2 + $0x17c] sm:$0xf]
    %v100 = vld [vmem:[#allocation2 + $0x180] sm:$0xff]
    %v101 = vld [vmem:[#allocation2 + $0x188] sm:$0xf]
    %v102 = vld [vmem:[#allocation2 + $0x18c] sm:$0xff]
    %v103 = vld [vmem:[#allocation2 + $0x194] sm:$0xf]
    %v104 = vld [vmem:[#allocation2 + $0x198] sm:$0xff]
    %v105 = vld [vmem:[#allocation2 + $0x1a0] sm:$0xf]
    %v106 = vld [vmem:[#allocation2 + $0x1a4] sm:$0xff]
    %v107 = vld [vmem:[#allocation2 + $0x1ac] sm:$0xf]
    %v108 = vld [vmem:[#allocation2 + $0x1b0] sm:$0xff]
    %v109 = vld [vmem:[#allocation2 + $0x1b8] sm:$0xf]
    %v110 = vld [vmem:[#allocation2 + $0x1bc] sm:$0xff]
    %v111 = vld [vmem:[#allocation2 + $0x1c4] sm:$0xf]
    %v112 = vld [vmem:[#allocation2 + $0x1c8] sm:$0xff]
    %v113 = vld [vmem:[#allocation2 + $0x1d0] sm:$0xf]
    %v114 = vld [vmem:[#allocation2 + $0x1d4] sm:$0xff]
    %v115 = vld [vmem:[#allocation2 + $0x1dc] sm:$0xf]
    %v116 = vld [vmem:[#allocation2 + $0x1e0] sm:$0xff]
    %v117 = vld [vmem:[#allocation2 + $0x1e8] sm:$0xf]
    %v118 = vld [vmem:[#allocation2 + $0x1ec] sm:$0xff]
    %v119 = vld [vmem:[#allocation2 + $0x1f4] sm:$0xf]
    %v120 = vld [vmem:[%s2] sm:$0x7]
    %v122 = vlaneseq
    %v123 = vshrl.u32 %v122, 7
    %v124 = vsub.s32 0, %v123
    %v125 = vrot.slane %v120, %v124
    %v126 = vlaneseq
    %v127 = vshrl.u32 %v126, 7
    %v128 = vsub.s32 1, %v127
    %v129 = vrot.slane %v120, %v128
    %v130 = vlaneseq
    %v131 = vshrl.u32 %v130, 7
    %v132 = vsub.s32 2, %v131
    %v133 = vrot.slane %v120, %v132
    %v139 = vunpack.c.l.s4 1966171168
    %v140 = vunpack.c.0.s8 %v139
    %v141 = vlaneseq
    %v142 = vshrl.u32 %v141, 7
    %v143 = vsub.s32 %v140, %v142
    %v144 = vrot.slane %v35, %v143
    %v145 = vcombine.high %v144, %v144
    %v147 = vunpack.c.l.s4 1966171168
    %v148 = vunpack.c.0.s8 %v147
    %v149 = vlaneseq
    %v150 = vshrl.u32 %v149, 7
    %v151 = vsub.s32 %v148, %v150
    %v152 = vrot.slane %v144, %v151
    %v154 = vunpack.c.l.s4 1966171168
    %v155 = vunpack.c.0.s8 %v154
    %v156 = vlaneseq
    %v157 = vshrl.u32 %v156, 7
    %v158 = vsub.s32 %v155, %v157
    %v159 = vrot.slane %v145, %v158
    %v160 = vcombine.high %v152, %v152
    %v247 = vunpack.c.l.b16 %v36
    %v248 = vunpack.c.h.b16 %v36
    %v249 = vunpack.c.l.b16 %v37
    %v250 = vunpack.c.l.b16 %v38
    %v251 = vunpack.c.h.b16 %v38
    %v252 = vunpack.c.l.b16 %v39
    %v253 = vunpack.c.l.b16 %v40
    %v254 = vunpack.c.h.b16 %v40
    %v255 = vunpack.c.l.b16 %v41
    %v256 = vunpack.c.l.b16 %v42
    %v257 = vunpack.c.h.b16 %v42
    %v258 = vunpack.c.l.b16 %v43
    %v259 = vunpack.c.l.b16 %v44
    %v260 = vunpack.c.h.b16 %v44
    %v261 = vunpack.c.l.b16 %v45
    %v262 = vunpack.c.l.b16 %v46
    %v263 = vunpack.c.h.b16 %v46
    %v264 = vunpack.c.l.b16 %v47
    %v265 = vunpack.c.l.b16 %v48
    %v266 = vunpack.c.h.b16 %v48
    %v267 = vunpack.c.l.b16 %v49
    %v268 = vunpack.c.l.b16 %v50
    %v269 = vunpack.c.h.b16 %v50
    %v270 = vunpack.c.l.b16 %v51
    %v271 = vunpack.c.l.b16 %v52
    %v272 = vunpack.c.h.b16 %v52
    %v273 = vunpack.c.l.b16 %v53
    %v274 = vunpack.c.l.b16 %v54
    %v275 = vunpack.c.h.b16 %v54
    %v276 = vunpack.c.l.b16 %v55
    %v277 = vunpack.c.l.b16 %v56
    %v278 = vunpack.c.h.b16 %v56
    %v279 = vunpack.c.l.b16 %v57
    %v280 = vunpack.c.l.b16 %v58
    %v281 = vunpack.c.h.b16 %v58
    %v282 = vunpack.c.l.b16 %v59
    %v283 = vunpack.c.l.b16 %v60
    %v284 = vunpack.c.h.b16 %v60
    %v285 = vunpack.c.l.b16 %v61
    %v286 = vunpack.c.l.b16 %v62
    %v287 = vunpack.c.h.b16 %v62
    %v288 = vunpack.c.l.b16 %v63
    %v289 = vunpack.c.l.b16 %v64
    %v290 = vunpack.c.h.b16 %v64
    %v291 = vunpack.c.l.b16 %v65
    %v292 = vunpack.c.l.b16 %v66
    %v293 = vunpack.c.h.b16 %v66
    %v294 = vunpack.c.l.b16 %v67
    %v295 = vunpack.c.l.b16 %v68
    %v296 = vunpack.c.h.b16 %v68
    %v297 = vunpack.c.l.b16 %v69
    %v298 = vunpack.c.l.b16 %v70
    %v299 = vunpack.c.h.b16 %v70
    %v300 = vunpack.c.l.b16 %v71
    %v301 = vunpack.c.l.b16 %v72
    %v302 = vunpack.c.h.b16 %v72
    %v303 = vunpack.c.l.b16 %v73
    %v304 = vunpack.c.l.b16 %v74
    %v305 = vunpack.c.h.b16 %v74
    %v306 = vunpack.c.l.b16 %v75
    %v307 = vunpack.c.l.b16 %v76
    %v308 = vunpack.c.h.b16 %v76
    %v309 = vunpack.c.l.b16 %v77
    %v310 = vunpack.c.l.b16 %v78
    %v311 = vunpack.c.h.b16 %v78
    %v312 = vunpack.c.l.b16 %v79
    %v313 = vunpack.c.l.b16 %v80
    %v314 = vunpack.c.h.b16 %v80
    %v315 = vunpack.c.l.b16 %v81
    %v316 = vunpack.c.l.b16 %v82
    %v317 = vunpack.c.h.b16 %v82
    %v318 = vunpack.c.l.b16 %v83
    %v319 = vunpack.c.l.b16 %v84
    %v320 = vunpack.c.h.b16 %v84
    %v321 = vunpack.c.l.b16 %v85
    %v322 = vunpack.c.l.b16 %v86
    %v323 = vunpack.c.h.b16 %v86
    %v324 = vunpack.c.l.b16 %v87
    %v325 = vunpack.c.l.b16 %v88
    %v326 = vunpack.c.h.b16 %v88
    %v327 = vunpack.c.l.b16 %v89
    %v328 = vunpack.c.l.b16 %v90
    %v329 = vunpack.c.h.b16 %v90
    %v330 = vunpack.c.l.b16 %v91
    %v331 = vunpack.c.l.b16 %v92
    %v332 = vunpack.c.h.b16 %v92
    %v333 = vunpack.c.l.b16 %v93
    %v334 = vunpack.c.l.b16 %v94
    %v335 = vunpack.c.h.b16 %v94
    %v336 = vunpack.c.l.b16 %v95
    %v337 = vunpack.c.l.b16 %v96
    %v338 = vunpack.c.h.b16 %v96
    %v339 = vunpack.c.l.b16 %v97
    %v340 = vunpack.c.l.b16 %v98
    %v341 = vunpack.c.h.b16 %v98
    %v342 = vunpack.c.l.b16 %v99
    %v343 = vunpack.c.l.b16 %v100
    %v344 = vunpack.c.h.b16 %v100
    %v345 = vunpack.c.l.b16 %v101
    %v346 = vunpack.c.l.b16 %v102
    %v347 = vunpack.c.h.b16 %v102
    %v348 = vunpack.c.l.b16 %v103
    %v349 = vunpack.c.l.b16 %v104
    %v350 = vunpack.c.h.b16 %v104
    %v351 = vunpack.c.l.b16 %v105
    %v352 = vunpack.c.l.b16 %v106
    %v353 = vunpack.c.h.b16 %v106
    %v354 = vunpack.c.l.b16 %v107
    %v355 = vunpack.c.l.b16 %v108
    %v356 = vunpack.c.h.b16 %v108
    %v357 = vunpack.c.l.b16 %v109
    %v358 = vunpack.c.l.b16 %v110
    %v359 = vunpack.c.h.b16 %v110
    %v360 = vunpack.c.l.b16 %v111
    %v361 = vunpack.c.l.b16 %v112
    %v362 = vunpack.c.h.b16 %v112
    %v363 = vunpack.c.l.b16 %v113
    %v364 = vunpack.c.l.b16 %v114
    %v365 = vunpack.c.h.b16 %v114
    %v366 = vunpack.c.l.b16 %v115
    %v367 = vunpack.c.l.b16 %v116
    %v368 = vunpack.c.h.b16 %v116
    %v369 = vunpack.c.l.b16 %v117
    %v370 = vunpack.c.l.b16 %v118
    %v371 = vunpack.c.h.b16 %v118
    %v372 = vunpack.c.l.b16 %v119
    %v373 = vpack.c.b16 %v250, %v247
    %v374 = vpack.c.b16 %v251, %v248
    %v375 = vpack.c.b16 %v252, %v249
    %v376 = vpack.c.b16 %v256, %v253
    %v377 = vpack.c.b16 %v257, %v254
    %v378 = vpack.c.b16 %v258, %v255
    %v379 = vpack.c.b16 %v262, %v259
    %v380 = vpack.c.b16 %v263, %v260
    %v381 = vpack.c.b16 %v264, %v261
    %v382 = vpack.c.b16 %v268, %v265
    %v383 = vpack.c.b16 %v269, %v266
    %v384 = vpack.c.b16 %v270, %v267
    %v385 = vpack.c.b16 %v274, %v271
    %v386 = vpack.c.b16 %v275, %v272
    %v387 = vpack.c.b16 %v276, %v273
    %v388 = vpack.c.b16 %v280, %v277
    %v389 = vpack.c.b16 %v281, %v278
    %v390 = vpack.c.b16 %v282, %v279
    %v391 = vpack.c.b16 %v286, %v283
    %v392 = vpack.c.b16 %v287, %v284
    %v393 = vpack.c.b16 %v288, %v285
    %v394 = vpack.c.b16 %v292, %v289
    %v395 = vpack.c.b16 %v293, %v290
    %v396 = vpack.c.b16 %v294, %v291
    %v397 = vpack.c.b16 %v298, %v295
    %v398 = vpack.c.b16 %v299, %v296
    %v399 = vpack.c.b16 %v300, %v297
    %v400 = vpack.c.b16 %v304, %v301
    %v401 = vpack.c.b16 %v305, %v302
    %v402 = vpack.c.b16 %v306, %v303
    %v403 = vpack.c.b16 %v310, %v307
    %v404 = vpack.c.b16 %v311, %v308
    %v405 = vpack.c.b16 %v312, %v309
    %v406 = vpack.c.b16 %v316, %v313
    %v407 = vpack.c.b16 %v317, %v314
    %v408 = vpack.c.b16 %v318, %v315
    %v409 = vpack.c.b16 %v322, %v319
    %v410 = vpack.c.b16 %v323, %v320
    %v411 = vpack.c.b16 %v324, %v321
    %v412 = vpack.c.b16 %v328, %v325
    %v413 = vpack.c.b16 %v329, %v326
    %v414 = vpack.c.b16 %v330, %v327
    %v415 = vpack.c.b16 %v334, %v331
    %v416 = vpack.c.b16 %v335, %v332
    %v417 = vpack.c.b16 %v336, %v333
    %v418 = vpack.c.b16 %v340, %v337
    %v419 = vpack.c.b16 %v341, %v338
    %v420 = vpack.c.b16 %v342, %v339
    %v421 = vpack.c.b16 %v346, %v343
    %v422 = vpack.c.b16 %v347, %v344
    %v423 = vpack.c.b16 %v348, %v345
    %v424 = vpack.c.b16 %v352, %v349
    %v425 = vpack.c.b16 %v353, %v350
    %v426 = vpack.c.b16 %v354, %v351
    %v427 = vpack.c.b16 %v358, %v355
    %v428 = vpack.c.b16 %v359, %v356
    %v429 = vpack.c.b16 %v360, %v357
    %v430 = vpack.c.b16 %v364, %v361
    %v431 = vpack.c.b16 %v365, %v362
    %v432 = vpack.c.b16 %v366, %v363
    %v433 = vpack.c.b16 %v370, %v367
    %v434 = vpack.c.b16 %v371, %v368
    %v435 = vpack.c.b16 %v372, %v369
    %vm499 = vcmask 654336
    %v501 = vsel %vm499, %v160, 0
    %503 = vmatprep.subr.bf16.mxu0 %v374
    %504 = vmatpush1.bf16.msra.mxu0 %v373
    %505 = vmatprep.subr.bf16.mxu0 %v377
    %506 = vmatpush1.bf16.msra.mxu0 %v376
    %507 = vmatprep.subr.bf16.mxu0 %v380
    %508 = vmatpush1.bf16.msra.mxu0 %v379
    %509 = vmatprep.subr.bf16.mxu0 %v383
    %510 = vmatpush1.bf16.msra.mxu0 %v382
    %511 = vmatprep.subr.bf16.mxu0 %v386
    %512 = vmatpush1.bf16.msra.mxu0 %v385
    %513 = vmatprep.subr.bf16.mxu0 %v389
    %514 = vmatpush1.bf16.msra.mxu0 %v388
    %515 = vmatprep.subr.bf16.mxu0 %v392
    %516 = vmatpush1.bf16.msra.mxu0 %v391
    %517 = vmatprep.subr.bf16.mxu0 %v395
    %518 = vmatpush1.bf16.msra.mxu0 %v394
    %519 = vmatprep.subr.bf16.mxu0 %v398
    %520 = vmatpush1.bf16.msra.mxu0 %v397
    %521 = vmatprep.subr.bf16.mxu0 %v401
    %522 = vmatpush1.bf16.msra.mxu0 %v400
    %523 = vmatprep.subr.bf16.mxu0 %v404
    %524 = vmatpush1.bf16.msra.mxu0 %v403
    %525 = vmatprep.subr.bf16.mxu0 %v407
    %526 = vmatpush1.bf16.msra.mxu0 %v406
    %527 = vmatprep.subr.bf16.mxu0 %v410
    %528 = vmatpush1.bf16.msra.mxu0 %v409
    %529 = vmatprep.subr.bf16.mxu0 %v413
    %530 = vmatpush1.bf16.msra.mxu0 %v412
    %531 = vmatprep.subr.bf16.mxu0 %v416
    %532 = vmatpush1.bf16.msra.mxu0 %v415
    %533 = vmatprep.subr.bf16.mxu0 %v419
    %534 = vmatpush1.bf16.msra.mxu0 %v418
    %535 = vmatprep.mubr.bf16.mxu0 %v159
    %536 = vmatmul.mubr.bf16.gmra.mrb[0].mxu0 %v152
    %v537 = vpop.f32.mrb[0].mxu0
    %v538 = vadd.f32 %v125, %v537
    %v539 = vpop.f32.mrb[0].mxu0
    %v540 = vadd.f32 %v129, %v539
    %v541 = vpop.f32.mrb[0].mxu0
    %v542 = vpop.f32.mrb[0].mxu0
    %543 = vdwg.mxu0
    %544 = vmatprep.subr.bf16.mxu0 %v422
    %545 = vmatpush1.bf16.msra.mxu0 %v421
    %546 = vmatprep.subr.bf16.mxu0 %v425
    %547 = vmatpush1.bf16.msra.mxu0 %v424
    %548 = vmatprep.subr.bf16.mxu0 %v428
    %549 = vmatpush1.bf16.msra.mxu0 %v427
    %550 = vmatprep.subr.bf16.mxu0 %v431
    %551 = vmatpush1.bf16.msra.mxu0 %v430
    %552 = vmatprep.subr.bf16.mxu0 %v434
    %553 = vmatpush1.bf16.msra.mxu0 %v433
    %554 = vmatprep.subr.bf16.mxu0 0
    %555 = vmatpush1.bf16.msra.mxu0 0
    %556 = vmatprep.subr.bf16.mxu0 0
    %557 = vmatpush1.bf16.msra.mxu0 0
    %558 = vmatprep.subr.bf16.mxu0 0
    %559 = vmatpush1.bf16.msra.mxu0 0
    %560 = vmatprep.subr.bf16.mxu0 0
    %561 = vmatpush1.bf16.msra.mxu0 0
    %562 = vmatprep.subr.bf16.mxu0 0
    %563 = vmatpush1.bf16.msra.mxu0 0
    %564 = vmatprep.subr.bf16.mxu0 0
    %565 = vmatpush1.bf16.msra.mxu0 0
    %566 = vmatprep.subr.bf16.mxu0 0
    %567 = vmatpush1.bf16.msra.mxu0 0
    %568 = vmatprep.subr.bf16.mxu0 0
    %569 = vmatpush1.bf16.msra.mxu0 0
    %570 = vmatprep.subr.bf16.mxu0 0
    %571 = vmatpush1.bf16.msra.mxu0 0
    %572 = vmatprep.subr.bf16.mxu0 0
    %573 = vmatpush1.bf16.msra.mxu0 0
    %574 = vmatprep.subr.bf16.mxu0 0
    %575 = vmatpush1.bf16.msra.mxu0 0
    %576 = vmatprep.mubr.bf16.mxu0 0
    %577 = vmatmul.mubr.bf16.gmra.mrb[0].mxu0 %v501
    %v578 = vpop.f32.mrb[0].mxu0
    %v579 = vadd.f32 %v538, %v578
    %v580 = vpop.f32.mrb[0].mxu0
    %v581 = vadd.f32 %v540, %v580
    %v582 = vpop.f32.mrb[0].mxu0
    %v583 = vpop.f32.mrb[0].mxu0
    %584 = vdwg.mxu0
    %585 = vmatprep.subr.bf16.mxu0 0
    %586 = vmatpush1.bf16.msra.mxu0 %v375
    %587 = vmatprep.subr.bf16.mxu0 0
    %588 = vmatpush1.bf16.msra.mxu0 %v378
    %589 = vmatprep.subr.bf16.mxu0 0
    %590 = vmatpush1.bf16.msra.mxu0 %v381
    %591 = vmatprep.subr.bf16.mxu0 0
    %592 = vmatpush1.bf16.msra.mxu0 %v384
    %593 = vmatprep.subr.bf16.mxu0 0
    %594 = vmatpush1.bf16.msra.mxu0 %v387
    %595 = vmatprep.subr.bf16.mxu0 0
    %596 = vmatpush1.bf16.msra.mxu0 %v390
    %597 = vmatprep.subr.bf16.mxu0 0
    %598 = vmatpush1.bf16.msra.mxu0 %v393
    %599 = vmatprep.subr.bf16.mxu0 0
    %600 = vmatpush1.bf16.msra.mxu0 %v396
    %601 = vmatprep.subr.bf16.mxu0 0
    %602 = vmatpush1.bf16.msra.mxu0 %v399
    %603 = vmatprep.subr.bf16.mxu0 0
    %604 = vmatpush1.bf16.msra.mxu0 %v402
    %605 = vmatprep.subr.bf16.mxu0 0
    %606 = vmatpush1.bf16.msra.mxu0 %v405
    %607 = vmatprep.subr.bf16.mxu0 0
    %608 = vmatpush1.bf16.msra.mxu0 %v408
    %609 = vmatprep.subr.bf16.mxu0 0
    %610 = vmatpush1.bf16.msra.mxu0 %v411
    %611 = vmatprep.subr.bf16.mxu0 0
    %612 = vmatpush1.bf16.msra.mxu0 %v414
    %613 = vmatprep.subr.bf16.mxu0 0
    %614 = vmatpush1.bf16.msra.mxu0 %v417
    %615 = vmatprep.subr.bf16.mxu0 0
    %616 = vmatpush1.bf16.msra.mxu0 %v420
    %617 = vmatprep.mubr.bf16.mxu0 %v159
    %618 = vmatmul.mubr.bf16.gmra.mrb[0].mxu0 %v152
    %v619 = vpop.f32.mrb[0].mxu0
    %v620 = vadd.f32 %v133, %v619
    %v621 = vpop.f32.mrb[0].mxu0
    %v622 = vpop.f32.mrb[0].mxu0
    %v623 = vpop.f32.mrb[0].mxu0
    %624 = vdwg.mxu0
    %625 = vmatprep.subr.bf16.mxu0 0
    %626 = vmatpush1.bf16.msra.mxu0 %v423
    %627 = vmatprep.subr.bf16.mxu0 0
    %628 = vmatpush1.bf16.msra.mxu0 %v426
    %629 = vmatprep.subr.bf16.mxu0 0
    %630 = vmatpush1.bf16.msra.mxu0 %v429
    %631 = vmatprep.subr.bf16.mxu0 0
    %632 = vmatpush1.bf16.msra.mxu0 %v432
    %633 = vmatprep.subr.bf16.mxu0 0
    %634 = vmatpush1.bf16.msra.mxu0 %v435
    %635 = vmatprep.subr.bf16.mxu0 0
    %636 = vmatpush1.bf16.msra.mxu0 0
    %637 = vmatprep.subr.bf16.mxu0 0
    %638 = vmatpush1.bf16.msra.mxu0 0
    %639 = vmatprep.subr.bf16.mxu0 0
    %640 = vmatpush1.bf16.msra.mxu0 0
    %641 = vmatprep.subr.bf16.mxu0 0
    %642 = vmatpush1.bf16.msra.mxu0 0
    %643 = vmatprep.subr.bf16.mxu0 0
    %644 = vmatpush1.bf16.msra.mxu0 0
    %645 = vmatprep.subr.bf16.mxu0 0
    %646 = vmatpush1.bf16.msra.mxu0 0
    %647 = vmatprep.subr.bf16.mxu0 0
    %648 = vmatpush1.bf16.msra.mxu0 0
    %649 = vmatprep.subr.bf16.mxu0 0
    %650 = vmatpush1.bf16.msra.mxu0 0
    %651 = vmatprep.subr.bf16.mxu0 0
    %652 = vmatpush1.bf16.msra.mxu0 0
    %653 = vmatprep.subr.bf16.mxu0 0
    %654 = vmatpush1.bf16.msra.mxu0 0
    %655 = vmatprep.subr.bf16.mxu0 0
    %656 = vmatpush1.bf16.msra.mxu0 0
    %657 = vmatprep.mubr.bf16.mxu0 0
    %658 = vmatmul.mubr.bf16.gmra.mrb[0].mxu0 %v501
    %v659 = vpop.f32.mrb[0].mxu0
    %v660 = vadd.f32 %v620, %v659
    %v661 = vpop.f32.mrb[0].mxu0
    %v662 = vpop.f32.mrb[0].mxu0
    %v663 = vpop.f32.mrb[0].mxu0
    %664 = vdwg.mxu0
    %v665 = vmul.f32 %v579, %v579
    %v666 = vmul.f32 %v581, %v581
    %v667 = vmul.f32 %v660, %v660
    %v668 = vsub.f32 0.0, %v665
    %v669 = vsub.f32 0.0, %v666
    %v670 = vsub.f32 0.0, %v667
    %v671 = vmax.f32 %v669, %v670
    %v672 = vmax.f32 %v668, %v671
    %v673 = vpack.c.bf16 %v672, %v672
    %v674 = vld [vmem:[%s3] sm:$0xf]
    %v675 = vld [vmem:[%s3 + $0x4] sm:$0xf]
    %v676 = vld [vmem:[%s3 + $0x8] sm:$0xf]
    %v677 = vld [vmem:[%s3 + $0xc] sm:$0xf]
    %v678 = vld [vmem:[%s3 + $0x10] sm:$0xf]
    %v679 = vld [vmem:[%s3 + $0x14] sm:$0xf]
    %v680 = vld [vmem:[%s3 + $0x18] sm:$0xf]
    %v681 = vld [vmem:[%s3 + $0x1c] sm:$0xf]
    %v682 = vld [vmem:[%s3 + $0x20] sm:$0xf]
    %v683 = vld [vmem:[%s3 + $0x24] sm:$0xf]
    %v684 = vld [vmem:[%s3 + $0x28] sm:$0xf]
    %v685 = vld [vmem:[%s3 + $0x2c] sm:$0xf]
    %v686 = vld [vmem:[%s3 + $0x30] sm:$0xf]
    %v687 = vld [vmem:[%s3 + $0x34] sm:$0xf]
    %v688 = vld [vmem:[%s3 + $0x38] sm:$0xf]
    %v689 = vld [vmem:[%s3 + $0x3c] sm:$0xf]
    %v690 = vld [vmem:[%s4] sm:$0x1]
    %v692 = vlaneseq
    %v693 = vshrl.u32 %v692, 7
    %v694 = vsub.s32 0, %v693
    %v695 = vrot.slane %v690, %v694
    %v713 = vunpack.c.l.b16 %v674
    %v714 = vunpack.c.l.b16 %v675
    %v715 = vunpack.c.l.b16 %v676
    %v716 = vunpack.c.l.b16 %v677
    %v717 = vunpack.c.l.b16 %v678
    %v718 = vunpack.c.l.b16 %v679
    %v719 = vunpack.c.l.b16 %v680
    %v720 = vunpack.c.l.b16 %v681
    %v721 = vunpack.c.l.b16 %v682
    %v722 = vunpack.c.l.b16 %v683
    %v723 = vunpack.c.l.b16 %v684
    %v724 = vunpack.c.l.b16 %v685
    %v725 = vunpack.c.l.b16 %v686
    %v726 = vunpack.c.l.b16 %v687
    %v727 = vunpack.c.l.b16 %v688
    %v728 = vunpack.c.l.b16 %v689
    %v729 = vpack.c.b16 %v714, %v713
    %v730 = vpack.c.b16 %v716, %v715
    %v731 = vpack.c.b16 %v718, %v717
    %v732 = vpack.c.b16 %v720, %v719
    %v733 = vpack.c.b16 %v722, %v721
    %v734 = vpack.c.b16 %v724, %v723
    %v735 = vpack.c.b16 %v726, %v725
    %v736 = vpack.c.b16 %v728, %v727
    %745 = vmatprep.subr.bf16.mxu0 0
    %746 = vmatpush1.bf16.msra.mxu0 %v729
    %747 = vmatprep.subr.bf16.mxu0 0
    %748 = vmatpush1.bf16.msra.mxu0 %v730
    %749 = vmatprep.subr.bf16.mxu0 0
    %750 = vmatpush1.bf16.msra.mxu0 %v731
    %751 = vmatprep.subr.bf16.mxu0 0
    %752 = vmatpush1.bf16.msra.mxu0 %v732
    %753 = vmatprep.subr.bf16.mxu0 0
    %754 = vmatpush1.bf16.msra.mxu0 %v733
    %755 = vmatprep.subr.bf16.mxu0 0
    %756 = vmatpush1.bf16.msra.mxu0 %v734
    %757 = vmatprep.subr.bf16.mxu0 0
    %758 = vmatpush1.bf16.msra.mxu0 %v735
    %759 = vmatprep.subr.bf16.mxu0 0
    %760 = vmatpush1.bf16.msra.mxu0 %v736
    %761 = vmatprep.subr.bf16.mxu0 0
    %762 = vmatpush1.bf16.msra.mxu0 0
    %763 = vmatprep.subr.bf16.mxu0 0
    %764 = vmatpush1.bf16.msra.mxu0 0
    %765 = vmatprep.subr.bf16.mxu0 0
    %766 = vmatpush1.bf16.msra.mxu0 0
    %767 = vmatprep.subr.bf16.mxu0 0
    %768 = vmatpush1.bf16.msra.mxu0 0
    %769 = vmatprep.subr.bf16.mxu0 0
    %770 = vmatpush1.bf16.msra.mxu0 0
    %771 = vmatprep.subr.bf16.mxu0 0
    %772 = vmatpush1.bf16.msra.mxu0 0
    %773 = vmatprep.subr.bf16.mxu0 0
    %774 = vmatpush1.bf16.msra.mxu0 0
    %775 = vmatprep.subr.bf16.mxu0 0
    %776 = vmatpush1.bf16.msra.mxu0 0
    %777 = vmatprep.mubr.bf16.mxu0 0
    %778 = vmatmul.mubr.bf16.gmra.mrb[0].mxu0 %v673
    %v779 = vpop.f32.mrb[0].mxu0
    %v780 = vadd.f32 %v695, %v779
    %v781 = vpop.f32.mrb[0].mxu0
    %v782 = vpop.f32.mrb[0].mxu0
    %v783 = vpop.f32.mrb[0].mxu0
    %784 = vdwg.mxu0
    %v785 = vpack.c.bf16 %v780, %v780
    %786 = vst [vmem:[%s5] sm:$0x1] %v785
    // Predicated region
    $region26: #{conv_shapelet_forward.1} parent=1 // pred_check
      _
    $region27: #{conv_shapelet_forward.1} parent=1 // pred_check_branch
      %788 = sbr.rel (0) target = $region29
    $region28: #{conv_shapelet_forward.1} parent=1 // pred_region
      _
    $region29: #{conv_shapelet_forward.1} parent=1 // pred_fallthru
      _
    // Predicated region
    $region30: #{conv_shapelet_forward.1} parent=1 // pred_check
      _
    $region31: #{conv_shapelet_forward.1} parent=1 // pred_check_branch
      %790 = sbr.rel (0) target = $region33
    $region32: #{conv_shapelet_forward.1} parent=1 // pred_region
      _
    $region33: #{conv_shapelet_forward.1} parent=1 // pred_fallthru
      _
    %791 = vsyncpa [#allocation3], 1

</llo_original>
